<compile_context>
chip_gen: v7x
topology: tpu7x:2x2x1
jax: 0.10.0
libtpu: 0.0.40
codegen_flags: <defaults>
</compile_context>

<pallas_src>
import jax
import jax.numpy as jnp
from jax import lax
from jax.experimental import pallas as pl
from jax.experimental.pallas import tpu as pltpu


def _cdiv(a, b):
    return -(-a // b)


def _round_up(x, m):
    return _cdiv(x, m) * m


def _proto_head_kernel(proto_ref, psq_ref, c_ref, q_ref, out_ref):
    # proto_ref: (1, NP, DP) bf16  centered prototypes (batch-resident, 1-buffered)
    # psq_ref:   (1, 1, NP)  f32   ||p - c||^2
    # c_ref:     (1, 1, DP)  f32   per-batch prototype mean (centering vector)
    # q_ref:     (1, TM, DP)       query tile
    # out_ref:   (1, TM, NP)       lane-dense logits tile
    q = q_ref[0].astype(jnp.float32) - c_ref[0]              # (TM, DP) centered, f32
    q_sq = jnp.sum(q * q, axis=-1, keepdims=True)            # (TM, 1) f32

    # Cross term on the MXU: contract DP (last dim of both) -> (TM, NP).
    cross = lax.dot_general(
        q.astype(jnp.bfloat16),
        proto_ref[0],                                        # already bf16 (hoisted cast)
        dimension_numbers=(((1,), (1,)), ((), ())),
        preferred_element_type=jnp.float32,
    )                                                        # (TM, NP) f32

    # -||q - p||^2 = 2*q.p - ||q||^2 - ||p||^2   (f32 epilogue; v5e has no bf16 VPU)
    out_ref[0] = (2.0 * cross - q_sq - psq_ref[0]).astype(out_ref.dtype)


def proto_head_forward(support, query, *, tm=512, q_buffers=2,
                       out_dtype=None, force_pallas=False):
    """support: (B, N, K, D); query: (B, N, Q, D) -> logits (B, N*Q, N)."""
    B, N, K, D = support.shape
    Q = query.shape[2]
    M = N * Q
    if out_dtype is None:
        out_dtype = query.dtype

    # Prototypes (small (B, N, D) tensor; accumulate mean in f32).
    prototypes = jnp.mean(support, axis=2, dtype=jnp.float32)          # (B, N, D)

    # Small-problem fast path: kernel fixed overhead + 128-lane padding would
    # cost more than XLA's fused broadcast-subtract-square.
    if not force_pallas and B * M * N * D * 4 <= (4 << 20):
        q = query.astype(jnp.float32).reshape(B, M, 1, D)
        err = q - prototypes[:, None, :, :]
        return (-jnp.sum(err * err, axis=3)).astype(out_dtype)

    # Per-batch centering (distance-invariant; shrinks magnitudes fed to bf16).
    center = jnp.mean(prototypes, axis=1, keepdims=True)                # (B, 1, D)
    proto_c = prototypes - center                                       # (B, N, D)

    # Lane-dense class axis; 256-aligned once N > 128 to fill the wide MXU.
    NP = _round_up(N, 128) if N <= 128 else _round_up(N, 256)
    # D is the contraction/lane axis of q and proto tiles; pad only if unaligned.
    DP = _round_up(D, 128)

    proto_pad = jnp.pad(proto_c, ((0, 0), (0, NP - N), (0, DP - D)))    # (B, NP, DP)
    proto_sq = jnp.sum(proto_pad * proto_pad, axis=-1)[:, None, :]      # (B, 1, NP) f32
    proto_bf16 = proto_pad.astype(jnp.bfloat16)                         # hoisted bf16 cast
    center_pad = jnp.pad(center, ((0, 0), (0, 0), (0, DP - D)))         # (B, 1, DP) f32

    query_flat = query.reshape(B, M, D)
    if DP != D:
        query_flat = jnp.pad(query_flat, ((0, 0), (0, 0), (0, DP - D)))

    # --- VMEM-aware tile size & limit -------------------------------------
    q_bytes = jnp.dtype(query_flat.dtype).itemsize
    o_bytes = jnp.dtype(out_dtype).itemsize
    resident = NP * DP * 2 + 8 * NP * 4 + 8 * DP * 4        # 1-buffered protos/psq/center
    per_row = q_buffers * DP * q_bytes + 2 * NP * o_bytes   # pipelined query + output rows
    budget = 40 * 1024 * 1024                               # leaves headroom on v7x (64 MiB)
    max_tm = max(8, ((budget - resident) // max(per_row, 1)) // 8 * 8)
    tm_eff = max(8, (min(int(tm), max_tm) // 8) * 8)
    # Balanced tiles: at most 7 padded rows per tile; the ragged tail is
    # masked by Pallas (no jnp.pad / row-slice passes over query/logits).
    m_tiles = _cdiv(M, tm_eff)
    TM = _round_up(_cdiv(M, m_tiles), 8)
    m_tiles = _cdiv(M, TM)
    vmem_limit = int(min(max(resident + TM * per_row + (2 << 20), 32 << 20), 120 << 20))

    grid_spec = pltpu.PrefetchScalarGridSpec(
        num_scalar_prefetch=0,
        grid=(B, m_tiles),
        in_specs=[
            # Batch-resident operands: constant block index along m -> DMA'd
            # once per batch; single-buffered to halve their VMEM footprint.
            pl.BlockSpec((1, NP, DP), lambda b, m: (b, 0, 0),
                         pipeline_mode=pl.Buffered(1)),
            pl.BlockSpec((1, 1, NP), lambda b, m: (b, 0, 0),
                         pipeline_mode=pl.Buffered(1)),
            pl.BlockSpec((1, 1, DP), lambda b, m: (b, 0, 0),
                         pipeline_mode=pl.Buffered(1)),
            # Streamed query tiles (pipeline depth sweepable via q_buffers).
            pl.BlockSpec((1, TM, DP), lambda b, m: (b, m, 0),
                         pipeline_mode=pl.Buffered(q_buffers)),
        ],
        out_specs=pl.BlockSpec((1, TM, NP), lambda b, m: (b, m, 0)),
    )

    logits_full = pl.pallas_call(
        _proto_head_kernel,
        out_shape=jax.ShapeDtypeStruct((B, M, NP), out_dtype),
        grid_spec=grid_spec,
        compiler_params=pltpu.CompilerParams(
            # Both grid axes are independent -> megacore/TC sharding even for small B.
            dimension_semantics=("parallel", "parallel"),
            vmem_limit_bytes=vmem_limit,
        ),
    )(proto_bf16, proto_sq, center_pad, query_flat)

    # Only the lane padding needs stripping; rows were never padded.
    return logits_full if NP == N else logits_full[:, :, :N]


def proto_head_reference(support, query):
    """Pure-JAX reference mirroring the PyTorch forward exactly."""
    B, N, K, D = support.shape
    Q = query.shape[2]
    prototypes = jnp.mean(support, axis=2)                   # (B, N, D)
    q = query.reshape(B, N * Q, D)[:, :, None, :]            # (B, N*Q, 1, D)
    p = prototypes[:, None, :, :]                             # (B, 1, N, D)
    err = q - p
    return -jnp.sum(err * err, axis=3)                        # (B, N*Q, N)


if __name__ == "__main__":
    key = jax.random.PRNGKey(0)
    k1, k2, k3, k4 = jax.random.split(key, 4)

    # Few-shot-style demo shapes: batch=2, N=4 ways, K=4 shots, Q=8 queries, D=32.
    B, N, K, Q, D = 2, 4, 4, 8, 32
    support = jax.random.normal(k1, (B, N, K, D), dtype=jnp.float32)
    query = jax.random.normal(k2, (B, N, Q, D), dtype=jnp.float32)
    ref = proto_head_reference(support, query)

    # 1) Default dispatch: small problem -> fused XLA fast path (exact).
    logits_fast = proto_head_forward(support, query)
    jax.block_until_ready(logits_fast)
    assert logits_fast.shape == (B, N * Q, N), logits_fast.shape
    assert jnp.allclose(logits_fast, ref, atol=1e-4, rtol=1e-4), (
        float(jnp.max(jnp.abs(logits_fast - ref))))

    # 2) Forced Pallas path on the same shapes (exercises the kernel; bf16 MXU
    #    cross term with f32 norms/epilogue -> moderate tolerance).
    logits_pallas = proto_head_forward(support, query, force_pallas=True)
    jax.block_until_ready(logits_pallas)
    assert logits_pallas.shape == (B, N * Q, N), logits_pallas.shape
    assert jnp.allclose(logits_pallas, ref, atol=5e-1, rtol=2e-2), (
        float(jnp.max(jnp.abs(logits_pallas - ref))))

    # 3) Forced Pallas path with ragged / unaligned shapes (M=35, D=40) and a
    #    tiny tile to exercise balanced tiling + boundary masking.
    B2, N2, K2, Q2, D2 = 2, 5, 3, 7, 40
    support2 = jax.random.normal(k3, (B2, N2, K2, D2), dtype=jnp.float32)
    query2 = jax.random.normal(k4, (B2, N2, Q2, D2), dtype=jnp.float32)
    ref2 = proto_head_reference(support2, query2)
    logits2 = proto_head_forward(support2, query2, force_pallas=True, tm=16)
    jax.block_until_ready(logits2)
    assert logits2.shape == (B2, N2 * Q2, N2), logits2.shape
    assert jnp.allclose(logits2, ref2, atol=5e-1, rtol=2e-2), (
        float(jnp.max(jnp.abs(logits2 - ref2))))

    print("KERNEL_OK")
</pallas_src>

<mosaic_0001>
module attributes {stable_mosaic.version = 11 : i64} {
  func.func @_proto_head_kernel(%arg0: i32, %arg1: i32, %arg2: memref<1x128x128xbf16, #tpu.memory_space<vmem>>, %arg3: memref<1x1x128xf32, #tpu.memory_space<vmem>>, %arg4: memref<1x1x128xf32, #tpu.memory_space<vmem>>, %arg5: memref<1x32x128xf32, #tpu.memory_space<vmem>>, %arg6: memref<1x32x128xf32, #tpu.memory_space<vmem>>) attributes {dimension_semantics = [#tpu.dimension_semantics<parallel>, #tpu.dimension_semantics<parallel>], iteration_bounds = array<i64: 2, 1>, scalar_prefetch = 0 : i64, scratch_operands = 0 : i64, tpu.core_type = #tpu.core_type<tc>, window_params = [{pipeline_mode = #tpu.pipeline_mode<synchronous>, transform_indices = @transform_0, window_bounds = array<i64: 1, 128, 128>}, {pipeline_mode = #tpu.pipeline_mode<synchronous>, transform_indices = @transform_1, window_bounds = array<i64: 1, 1, 128>}, {pipeline_mode = #tpu.pipeline_mode<synchronous>, transform_indices = @transform_2, window_bounds = array<i64: 1, 1, 128>}, {pipeline_mode = #tpu.pipeline_mode<double_buffered>, transform_indices = @transform_3, window_bounds = array<i64: 1, 32, 128>}, {transform_indices = @transform_4, window_bounds = array<i64: 1, 32, 128>}]} {
    %c0 = arith.constant 0 : index
    %c0_0 = arith.constant 0 : index
    %c0_1 = arith.constant 0 : index
    %0 = vector.load %arg5[%c0, %c0_0, %c0_1] : memref<1x32x128xf32, #tpu.memory_space<vmem>>, vector<1x32x128xf32>
    %1 = vector.shape_cast %0 : vector<1x32x128xf32> to vector<32x128xf32>
    %c0_2 = arith.constant 0 : index
    %c0_3 = arith.constant 0 : index
    %c0_4 = arith.constant 0 : index
    %2 = vector.load %arg4[%c0_2, %c0_3, %c0_4] : memref<1x1x128xf32, #tpu.memory_space<vmem>>, vector<1x1x128xf32>
    %3 = vector.shape_cast %2 : vector<1x1x128xf32> to vector<1x128xf32>
    %4 = vector.broadcast %3 : vector<1x128xf32> to vector<32x128xf32>
    %5 = arith.subf %1, %4 : vector<32x128xf32>
    %6 = arith.mulf %5, %5 : vector<32x128xf32>
    %cst = arith.constant dense<0.000000e+00> : vector<32xf32>
    %7 = vector.multi_reduction <add>, %6, %cst [1] : vector<32x128xf32> to vector<32xf32>
    %8 = vector.shape_cast %7 : vector<32xf32> to vector<32x1xf32>
    %9 = arith.truncf %5 : vector<32x128xf32> to vector<32x128xbf16>
    %c0_5 = arith.constant 0 : index
    %c0_6 = arith.constant 0 : index
    %c0_7 = arith.constant 0 : index
    %10 = vector.load %arg2[%c0_5, %c0_6, %c0_7] : memref<1x128x128xbf16, #tpu.memory_space<vmem>>, vector<1x128x128xbf16>
    %11 = vector.shape_cast %10 : vector<1x128x128xbf16> to vector<128x128xbf16>
    %cst_8 = arith.constant dense<0.000000e+00> : vector<32x128xf32>
    %12 = tpu.matmul %9, %11, %cst_8 {dimension_numbers = #tpu.dot_dimension_numbers<[1], [1], [0], [0], [0, 0, 1, 0], [], []>} : vector<32x128xbf16>, vector<128x128xbf16>, vector<32x128xf32> -> vector<32x128xf32>
    %cst_9 = arith.constant 2.000000e+00 : f32
    %13 = vector.broadcast %cst_9 : f32 to vector<32x128xf32>
    %14 = arith.mulf %13, %12 : vector<32x128xf32>
    %15 = vector.broadcast %8 : vector<32x1xf32> to vector<32x128xf32>
    %16 = arith.subf %14, %15 : vector<32x128xf32>
    %c0_10 = arith.constant 0 : index
    %c0_11 = arith.constant 0 : index
    %c0_12 = arith.constant 0 : index
    %17 = vector.load %arg3[%c0_10, %c0_11, %c0_12] : memref<1x1x128xf32, #tpu.memory_space<vmem>>, vector<1x1x128xf32>
    %18 = vector.shape_cast %17 : vector<1x1x128xf32> to vector<1x128xf32>
    %19 = vector.broadcast %18 : vector<1x128xf32> to vector<32x128xf32>
    %20 = arith.subf %16, %19 : vector<32x128xf32>
    %c0_13 = arith.constant 0 : index
    %c0_14 = arith.constant 0 : index
    %c0_15 = arith.constant 0 : index
    %21 = vector.load %arg6[%c0_13, %c0_14, %c0_15] : memref<1x32x128xf32, #tpu.memory_space<vmem>>, vector<1x32x128xf32>
    %22 = vector.shape_cast %21 : vector<1x32x128xf32> to vector<32x128xf32>
    %23 = vector.shape_cast %20 : vector<32x128xf32> to vector<1x32x128xf32>
    tpu.vector_store %arg6[%c0_13, %c0_14, %c0_15], %23 {strides = array<i32>} : memref<1x32x128xf32, #tpu.memory_space<vmem>>, vector<1x32x128xf32>,
    return
  }
  func.func @transform_0(%arg0: i32, %arg1: i32) -> (i32, i32, i32) {
    %c0_i32 = arith.constant 0 : i32
    %c0_i32_0 = arith.constant 0 : i32
    %c0_i32_1 = arith.constant 0 : i32
    return %arg0, %c0_i32, %c0_i32_0 : i32, i32, i32
  }
  func.func @transform_1(%arg0: i32, %arg1: i32) -> (i32, i32, i32) {
    %c0_i32 = arith.constant 0 : i32
    %c0_i32_0 = arith.constant 0 : i32
    %c0_i32_1 = arith.constant 0 : i32
    return %arg0, %c0_i32, %c0_i32_0 : i32, i32, i32
  }
  func.func @transform_2(%arg0: i32, %arg1: i32) -> (i32, i32, i32) {
    %c0_i32 = arith.constant 0 : i32
    %c0_i32_0 = arith.constant 0 : i32
    %c0_i32_1 = arith.constant 0 : i32
    return %arg0, %c0_i32, %c0_i32_0 : i32, i32, i32
  }
  func.func @transform_3(%arg0: i32, %arg1: i32) -> (i32, i32, i32) {
    %c0_i32 = arith.constant 0 : i32
    %c0_i32_0 = arith.constant 0 : i32
    return %arg0, %arg1, %c0_i32 : i32, i32, i32
  }
  func.func @transform_4(%arg0: i32, %arg1: i32) -> (i32, i32, i32) {
    %c0_i32 = arith.constant 0 : i32
    %c0_i32_0 = arith.constant 0 : i32
    return %arg0, %arg1, %c0_i32 : i32, i32, i32
  }
}

</mosaic_0001>

<llo_original>
// kernel: tpu_custom_call.1
$region0: #{tpu_custom_call.1}
  #allocation0 [shape = 'u32[]', space=smem, size = 0x4, offset = 0x4, fixed_abs, tag = 'smem constant byte address 0x4 - core index']
  #allocation1 [shape = 'u32[144,128]{1,0:T(1,128)}', space=vmem, size = 0x12000, scoped, tag = 'internal scratch']
  %s0 = inlined_call_operand.hbm [shape: bf16[2,128,128], index: 0, kind: input, shape index: {}]
  %s1 = inlined_call_operand.vmem [shape: f32[2,1,128], index: 1, kind: input, shape index: {}]
  %s2 = inlined_call_operand.vmem [shape: f32[2,1,128], index: 2, kind: input, shape index: {}]
  %s3 = inlined_call_operand.hbm [shape: f32[2,32,128], index: 3, kind: input, shape index: {}]
  %s4 = inlined_call_operand.hbm [shape: f32[2,32,128], index: 4, kind: output, shape index: {}]
  %s5 = sld [smem:[#allocation0]]
  $region57: #{tpu_custom_call.1} parent=0
    _
  %s7 = ssub.s32 1, %s5
  %s8 = scalar_select 0, %s7, %s5
  $region1: #{tpu_custom_call.1} parent=0
    #allocation2 [shape = 'u8[32768]{0}', space=vmem, size = 0x8000, scoped, tag = 'input window, operand 0, single buffered']
    #allocation3 [shape = 's32[2]{0}', space=sflag, size = 0x8, scoped, tag = 'scoped memory for tpu_custom_call.1']
    #allocation4 [shape = 's32[2]{0}', space=sflag, size = 0x8, scoped, tag = 'scoped memory for tpu_custom_call.1']
    #allocation5 [shape = 'u8[32768]{0}', space=vmem, size = 0x8000, scoped, tag = 'input window, operand 3']
    #allocation6 [shape = 's32[2]{0}', space=sflag, size = 0x8, scoped, tag = 'scoped memory for tpu_custom_call.1']
    #allocation7 [shape = 'u8[32768]{0}', space=vmem, size = 0x8000, scoped, tag = 'output window, operand 0']
    %9 = vsyncpa [#allocation3], 0
    %10 = vsyncpa [#allocation6], 0
    %s11 = scalar_lea.sflag [#allocation6], 1
    %12 = vsyncpa %s11, 0
    %13 = vsyncpa [#allocation4], 0
    %s14 = scalar_lea.sflag [#allocation4], 1
    %15 = vsyncpa %s14, 0
    loop: start=0, step=1, limit=4
    $region2: #{tpu_custom_call.1} parent=1 // loop_pre_header
      _
    $region3: #{tpu_custom_call.1} parent=1 // loop_header
      %s17 = sphi 0, %s21
      %p18 = scmp.ge.s32.totalorder %s17, 4
      %s24 = sphi 0, %s36
      %s25 = sphi 0, %s32
      %s26 = sphi 0, %s24
      %s27 = sphi 0, %s25
      %s28 = sphi 0, %s26
      %s29 = sphi 0, %s27
      %s39 = sphi 0, %s41
      %s42 = sphi 0, %s39
      %s43 = sphi 0, %s42
      %s59 = sphi 0, %s43
      %s65 = sphi 0, %s67
      %s68 = sphi 0, %s65
      %s69 = sphi 0, %s68
      %s85 = sphi 0, %s69
      %s91 = sphi 0, %s93
      %s94 = sphi 0, %s91
      %s95 = sphi 0, %s94
      %s111 = sphi 0, %s95
      %s119 = sphi 0, %s121
      %s122 = sphi 0, %s119
      %s123 = sphi 0, %s122
      %s139 = sphi 0, %s123
      %s147 = sphi 0, %s149
      %s150 = sphi 0, %s147
      %s151 = sphi 0, %s150
      %s167 = sphi 0, %s151
    $region4: #{tpu_custom_call.1} parent=1 // loop_header_branch
      %20 = sbr.rel (%p18) target = $region8
    $region5: #{tpu_custom_call.1} parent=1 // loop_body
      %s22 = ssub.s32 %s17, 1
      %s23 = ssub.s32 %s17, 2
      %s30 = sadd.s32 1, %s25
      %p31 = scmp.ge.s32.totalorder %s30, 1
      %s32 = scalar_select %p31, 0, %s30
      %s33 = sadd.s32 1, %s24
      %s34 = scalar_select %p31, %s33, %s24
      %p35 = scmp.ge.s32.totalorder %s34, 2
      %s36 = scalar_select %p35, 0, %s34
      %s37 = ssub.s32 %s24, %s36
      %p38 = scmp.eq.s32.totalorder %s37, 0
      %s40 = sadd.s32 %s39, 1
      %s41 = scalar_select %p38, %s39, %s40
      %p44 = pneg %p38
      %p45 = scmp.eq.s32.totalorder %s17, 1
      %p46 = por %p44, %p45
      %p47 = scmp.ne.s32.totalorder %s39, %s42
      %p48 = scmp.eq.s32.totalorder %s17, 0
      %p49 = por %p47, %p48
      %p50 = scmp.ne.s32.totalorder %s39, %s42
      %p51 = scmp.eq.s32.totalorder %s22, 1
      %p52 = por %p50, %p51
      %p53 = scmp.ne.s32.totalorder %s42, %s43
      %p54 = scmp.eq.s32.totalorder %s22, 0
      %p55 = por %p53, %p54
      %p56 = scmp.ne.s32.totalorder %s42, %s43
      %p57 = scmp.eq.s32.totalorder %s23, 1
      %p58 = por %p56, %p57
      %p60 = scmp.ne.s32.totalorder %s43, %s59
      %p61 = scmp.eq.s32.totalorder %s23, 0
      %p62 = por %p60, %p61
      %s63 = ssub.s32 %s24, %s36
      %p64 = scmp.eq.s32.totalorder %s63, 0
      %s66 = sadd.s32 %s65, 1
      %s67 = scalar_select %p64, %s65, %s66
      %p70 = pneg %p64
      %p71 = scmp.eq.s32.totalorder %s17, 1
      %p72 = por %p70, %p71
      %p73 = scmp.ne.s32.totalorder %s65, %s68
      %p74 = scmp.eq.s32.totalorder %s17, 0
      %p75 = por %p73, %p74
      %p76 = scmp.ne.s32.totalorder %s65, %s68
      %p77 = scmp.eq.s32.totalorder %s22, 1
      %p78 = por %p76, %p77
      %p79 = scmp.ne.s32.totalorder %s68, %s69
      %p80 = scmp.eq.s32.totalorder %s22, 0
      %p81 = por %p79, %p80
      %p82 = scmp.ne.s32.totalorder %s68, %s69
      %p83 = scmp.eq.s32.totalorder %s23, 1
      %p84 = por %p82, %p83
      %p86 = scmp.ne.s32.totalorder %s69, %s85
      %p87 = scmp.eq.s32.totalorder %s23, 0
      %p88 = por %p86, %p87
      %s89 = ssub.s32 %s24, %s36
      %p90 = scmp.eq.s32.totalorder %s89, 0
      %s92 = sadd.s32 %s91, 1
      %s93 = scalar_select %p90, %s91, %s92
      %p96 = pneg %p90
      %p97 = scmp.eq.s32.totalorder %s17, 1
      %p98 = por %p96, %p97
      %p99 = scmp.ne.s32.totalorder %s91, %s94
      %p100 = scmp.eq.s32.totalorder %s17, 0
      %p101 = por %p99, %p100
      %p102 = scmp.ne.s32.totalorder %s91, %s94
      %p103 = scmp.eq.s32.totalorder %s22, 1
      %p104 = por %p102, %p103
      %p105 = scmp.ne.s32.totalorder %s94, %s95
      %p106 = scmp.eq.s32.totalorder %s22, 0
      %p107 = por %p105, %p106
      %p108 = scmp.ne.s32.totalorder %s94, %s95
      %p109 = scmp.eq.s32.totalorder %s23, 1
      %p110 = por %p108, %p109
      %p112 = scmp.ne.s32.totalorder %s95, %s111
      %p113 = scmp.eq.s32.totalorder %s23, 0
      %p114 = por %p112, %p113
      %s115 = ssub.s32 %s24, %s36
      %s116 = ssub.s32 %s25, %s32
      %s117 = sor.u32 %s115, %s116
      %p118 = scmp.eq.s32.totalorder %s117, 0
      %s120 = sadd.s32 %s119, 1
      %s121 = scalar_select %p118, %s119, %s120
      %p124 = pneg %p118
      %p125 = scmp.eq.s32.totalorder %s17, 1
      %p126 = por %p124, %p125
      %p127 = scmp.ne.s32.totalorder %s119, %s122
      %p128 = scmp.eq.s32.totalorder %s17, 0
      %p129 = por %p127, %p128
      %p130 = scmp.ne.s32.totalorder %s119, %s122
      %p131 = scmp.eq.s32.totalorder %s22, 1
      %p132 = por %p130, %p131
      %p133 = scmp.ne.s32.totalorder %s122, %s123
      %p134 = scmp.eq.s32.totalorder %s22, 0
      %p135 = por %p133, %p134
      %p136 = scmp.ne.s32.totalorder %s122, %s123
      %p137 = scmp.eq.s32.totalorder %s23, 1
      %p138 = por %p136, %p137
      %p140 = scmp.ne.s32.totalorder %s123, %s139
      %p141 = scmp.eq.s32.totalorder %s23, 0
      %p142 = por %p140, %p141
      %s143 = ssub.s32 %s24, %s36
      %s144 = ssub.s32 %s25, %s32
      %s145 = sor.u32 %s143, %s144
      %p146 = scmp.eq.s32.totalorder %s145, 0
      %s148 = sadd.s32 %s147, 1
      %s149 = scalar_select %p146, %s147, %s148
      %p152 = pneg %p146
      %p153 = scmp.eq.s32.totalorder %s17, 1
      %p154 = por %p152, %p153
      %p155 = scmp.ne.s32.totalorder %s147, %s150
      %p156 = scmp.eq.s32.totalorder %s17, 0
      %p157 = por %p155, %p156
      %p158 = scmp.ne.s32.totalorder %s147, %s150
      %p159 = scmp.eq.s32.totalorder %s22, 1
      %p160 = por %p158, %p159
      %p161 = scmp.ne.s32.totalorder %s150, %s151
      %p162 = scmp.eq.s32.totalorder %s22, 0
      %p163 = por %p161, %p162
      %p164 = scmp.ne.s32.totalorder %s150, %s151
      %p165 = scmp.eq.s32.totalorder %s23, 1
      %p166 = por %p164, %p165
      %p168 = scmp.ne.s32.totalorder %s151, %s167
      %p169 = scmp.eq.s32.totalorder %s23, 0
      %p170 = por %p168, %p169
      %p171 = scmp.le.s32.totalorder 1, %s17
      %p172 = scmp.lt.s32.totalorder %s17, 3
      %p173 = pnand %p171, %p172
      %p174 = pneg %p173
      // Predicated region
      $region9: #{tpu_custom_call.1} parent=5 // pred_check
        _
      $region10: #{tpu_custom_call.1} parent=5 // pred_check_branch
        %176 = sbr.rel (%p173) target = $region12
      $region11: #{tpu_custom_call.1} parent=5 // pred_region
        %s177 = ssub.s32 %s17, 1
        // Predicated region
        $region13: #{tpu_custom_call.1} parent=11 // pred_check
          %p178 = pneg %p55
        $region14: #{tpu_custom_call.1} parent=11 // pred_check_branch
          %180 = sbr.rel (%p178) target = $region16
        $region15: #{tpu_custom_call.1} parent=11 // pred_region
          %s182 = ssub.s32 1024, 1024
          %183 = vsyncadd [#allocation3], %s182
          %s184 = smul.addr %s26, 16
          %s185 = smul.addr %s184, 64
          %s186 = scalar_lea.hbm %s0, %s185
          %s187 = sshll.u32 [#allocation2], 4
          %s188 = int_to_ptr.vmem [resolvable:$true] %s187
          %193 = dma.hbm_to_vmem [thread:$0]  %s186, 1024, %s188, [#allocation3], 64, 64, 4
        $region16: #{tpu_custom_call.1} parent=11 // pred_fallthru
          _
        // Predicated region
        $region17: #{tpu_custom_call.1} parent=11 // pred_check
          %p194 = pneg %p81
        $region18: #{tpu_custom_call.1} parent=11 // pred_check_branch
          %196 = sbr.rel (%p194) target = $region20
        $region19: #{tpu_custom_call.1} parent=11 // pred_region
          %p197 = scmp.lt.s32.totalorder %s26, 1
          %s198 = scalar_select %p197, %s26, 1
          %s199 = scalar_lea.vmem %s1, %s198
        $region20: #{tpu_custom_call.1} parent=11 // pred_fallthru
          _
        // Predicated region
        $region21: #{tpu_custom_call.1} parent=11 // pred_check
          %p200 = pneg %p107
        $region22: #{tpu_custom_call.1} parent=11 // pred_check_branch
          %202 = sbr.rel (%p200) target = $region24
        $region23: #{tpu_custom_call.1} parent=11 // pred_region
          %p203 = scmp.lt.s32.totalorder %s26, 1
          %s204 = scalar_select %p203, %s26, 1
          %s205 = scalar_lea.vmem %s2, %s204
        $region24: #{tpu_custom_call.1} parent=11 // pred_fallthru
          _
      $region12: #{tpu_custom_call.1} parent=5 // pred_fallthru
        _
      %p206 = scmp.lt.s32.totalorder %s17, 2
      // Predicated region
      $region25: #{tpu_custom_call.1} parent=5 // pred_check
        %p207 = pneg %p206
      $region26: #{tpu_custom_call.1} parent=5 // pred_check_branch
        %209 = sbr.rel (%p207) target = $region28
      $region27: #{tpu_custom_call.1} parent=5 // pred_region
        // Predicated region
        $region29: #{tpu_custom_call.1} parent=27 // pred_check
          %p210 = pneg %p129
        $region30: #{tpu_custom_call.1} parent=27 // pred_check_branch
          %212 = sbr.rel (%p210) target = $region32
        $region31: #{tpu_custom_call.1} parent=27 // pred_region
          %s213 = sand.u32 %s119, 1
          %s214 = scalar_lea.sflag [#allocation6], %s213
          %s215 = sand.u32 %s119, 1
          %s216 = smul.addr %s215, 32
          %s217 = scalar_lea.vmem [#allocation5], %s216
          %s218 = smul.u32 4, %s25
          %s220 = ssub.s32 512, 512
          %221 = vsyncadd %s214, %s220
          %s222 = smul.addr %s24, 4
          %s223 = sadd.s32 %s218, %s222
          %s224 = smul.addr %s223, 128
          %s225 = scalar_lea.hbm %s3, %s224
          %s226 = sshll.u32 %s217, 4
          %s227 = int_to_ptr.vmem [resolvable:$true] %s226
          %232 = dma.hbm_to_vmem [thread:$0]  %s225, 512, %s227, %s214, 128, 128, 8
        $region32: #{tpu_custom_call.1} parent=27 // pred_fallthru
          _
      $region28: #{tpu_custom_call.1} parent=5 // pred_fallthru
        _
      %p233 = scmp.le.s32.totalorder 1, %s17
      %p234 = scmp.lt.s32.totalorder %s17, 3
      %p235 = pnand %p233, %p234
      %p236 = pneg %p235
      // Predicated region
      $region33: #{tpu_custom_call.1} parent=5 // pred_check
        _
      $region34: #{tpu_custom_call.1} parent=5 // pred_check_branch
        %238 = sbr.rel (%p235) target = $region36
      $region35: #{tpu_custom_call.1} parent=5 // pred_region
        %s239 = ssub.s32 %s17, 1
        // Predicated region
        $region37: #{tpu_custom_call.1} parent=35 // pred_check
          %p240 = pneg %p55
        $region38: #{tpu_custom_call.1} parent=35 // pred_check_branch
          %242 = sbr.rel (%p240) target = $region40
        $region39: #{tpu_custom_call.1} parent=35 // pred_region
          %243 = dma.done [#allocation3], 1024
        $region40: #{tpu_custom_call.1} parent=35 // pred_fallthru
          _
        %s244 = sand.u32 %s122, 1
        %s245 = scalar_lea.sflag [#allocation6], %s244
        %s246 = sand.u32 %s122, 1
        %s247 = smul.addr %s246, 32
        %s248 = scalar_lea.vmem [#allocation5], %s247
        // Predicated region
        $region41: #{tpu_custom_call.1} parent=35 // pred_check
          %p249 = pneg %p135
        $region42: #{tpu_custom_call.1} parent=35 // pred_check_branch
          %251 = sbr.rel (%p249) target = $region44
        $region43: #{tpu_custom_call.1} parent=35 // pred_region
          %252 = dma.done %s245, 512
        $region44: #{tpu_custom_call.1} parent=35 // pred_fallthru
          _
        %p253 = pneg %p55
        %p254 = pneg %p52
        %p255 = scmp.lt.s32.totalorder %s26, 1
        %s256 = scalar_select %p255, %s26, 1
        %s257 = scalar_lea.vmem %s1, %s256
        %p258 = pneg %p81
        %p259 = pneg %p78
        %p260 = scmp.lt.s32.totalorder %s26, 1
        %s261 = scalar_select %p260, %s26, 1
        %s262 = scalar_lea.vmem %s2, %s261
        %p263 = pneg %p107
        %p264 = pneg %p104
        %s265 = sand.u32 %s122, 1
        %s266 = scalar_lea.sflag [#allocation6], %s265
        %s267 = sand.u32 %s122, 1
        %s268 = smul.addr %s267, 32
        %s269 = scalar_lea.vmem [#allocation5], %s268
        %p270 = pneg %p135
        %p271 = pneg %p132
        %p272 = pneg %p163
        %p273 = pneg %p160
        %s274 = sand.u32 %s150, 1
        %s275 = scalar_lea.sflag [#allocation4], %s274
        %s276 = sand.u32 %s150, 1
        %s277 = smul.addr %s276, 32
        %s278 = scalar_lea.vmem [#allocation7], %s277
        %p279 = scmp.lt.s32.totalorder %s26, 1
        %s280 = scalar_select %p279, %s26, 1
        %s281 = scalar_lea.vmem %s1, %s280
        %p282 = scmp.lt.s32.totalorder %s26, 1
        %s283 = scalar_select %p282, %s26, 1
        %s284 = scalar_lea.vmem %s2, %s283
        %s285 = smul.u32 4, %s27
        %s286 = smul.u32 4, %s27
        %v288 = vld [vmem:[%s248] sm:$0xff]
        %v289 = vld [vmem:[%s248 + $0x8] sm:$0xff]
        %v290 = vld [vmem:[%s248 + $0x10] sm:$0xff]
        %v291 = vld [vmem:[%s248 + $0x18] sm:$0xff]
        %v292 = vld [vmem:[%s284] sm:$0x1]
        %v294 = vlaneseq
        %v295 = vshrl.u32 %v294, 7
        %v296 = vsub.s32 0, %v295
        %v297 = vrot.slane %v292, %v296
        %v299 = vsub.f32 %v288, %v297
        %v300 = vsub.f32 %v289, %v297
        %v301 = vsub.f32 %v290, %v297
        %v302 = vsub.f32 %v291, %v297
        %v303 = vmul.f32 %v299, %v299
        %v304 = vmul.f32 %v300, %v300
        %v305 = vmul.f32 %v301, %v301
        %v306 = vmul.f32 %v302, %v302
        %307 = vadd.xlane.f32.xlu0 %v303
        %v308 = vpop.xlane.xlu0 %307
        %309 = vadd.xlane.f32.xlu0 %v304
        %v310 = vpop.xlane.xlu0 %309
        %311 = vadd.xlane.f32.xlu0 %v305
        %v312 = vpop.xlane.xlu0 %311
        %313 = vadd.xlane.f32.xlu0 %v306
        %v314 = vpop.xlane.xlu0 %313
        %v315 = vpack.c.bf16 %v300, %v299
        %v316 = vpack.c.bf16 %v302, %v301
        %v317 = vld [vmem:[#allocation2] sm:$0xf]
        %v318 = vld [vmem:[#allocation2 + $0x4] sm:$0xf]
        %v319 = vld [vmem:[#allocation2 + $0x8] sm:$0xf]
        %v320 = vld [vmem:[#allocation2 + $0xc] sm:$0xf]
        %v321 = vld [vmem:[#allocation2 + $0x10] sm:$0xf]
        %v322 = vld [vmem:[#allocation2 + $0x14] sm:$0xf]
        %v323 = vld [vmem:[#allocation2 + $0x18] sm:$0xf]
        %v324 = vld [vmem:[#allocation2 + $0x1c] sm:$0xf]
        %v325 = vld [vmem:[#allocation2 + $0x20] sm:$0xf]
        %v326 = vld [vmem:[#allocation2 + $0x24] sm:$0xf]
        %v327 = vld [vmem:[#allocation2 + $0x28] sm:$0xf]
        %v328 = vld [vmem:[#allocation2 + $0x2c] sm:$0xf]
        %v329 = vld [vmem:[#allocation2 + $0x30] sm:$0xf]
        %v330 = vld [vmem:[#allocation2 + $0x34] sm:$0xf]
        %v331 = vld [vmem:[#allocation2 + $0x38] sm:$0xf]
        %v332 = vld [vmem:[#allocation2 + $0x3c] sm:$0xf]
        %v349 = vunpack.c.l.b16 %v317
        %v350 = vunpack.c.l.b16 %v318
        %v351 = vunpack.c.l.b16 %v319
        %v352 = vunpack.c.l.b16 %v320
        %v353 = vunpack.c.l.b16 %v321
        %v354 = vunpack.c.l.b16 %v322
        %v355 = vunpack.c.l.b16 %v323
        %v356 = vunpack.c.l.b16 %v324
        %v357 = vunpack.c.l.b16 %v325
        %v358 = vunpack.c.l.b16 %v326
        %v359 = vunpack.c.l.b16 %v327
        %v360 = vunpack.c.l.b16 %v328
        %v361 = vunpack.c.l.b16 %v329
        %v362 = vunpack.c.l.b16 %v330
        %v363 = vunpack.c.l.b16 %v331
        %v364 = vunpack.c.l.b16 %v332
        %v365 = vpack.c.b16 %v350, %v349
        %v366 = vpack.c.b16 %v352, %v351
        %v367 = vpack.c.b16 %v354, %v353
        %v368 = vpack.c.b16 %v356, %v355
        %v369 = vpack.c.b16 %v358, %v357
        %v370 = vpack.c.b16 %v360, %v359
        %v371 = vpack.c.b16 %v362, %v361
        %v372 = vpack.c.b16 %v364, %v363
        %381 = vmatprep.subr.bf16.mxu0 0
        %382 = vmatpush1.bf16.xpose.msra.mxu0 %v365
        %383 = vmatprep.subr.bf16.mxu0 0
        %384 = vmatpush1.bf16.xpose.msra.mxu0 %v366
        %385 = vmatprep.subr.bf16.mxu0 0
        %386 = vmatpush1.bf16.xpose.msra.mxu0 %v367
        %387 = vmatprep.subr.bf16.mxu0 0
        %388 = vmatpush1.bf16.xpose.msra.mxu0 %v368
        %389 = vmatprep.subr.bf16.mxu0 0
        %390 = vmatpush1.bf16.xpose.msra.mxu0 %v369
        %391 = vmatprep.subr.bf16.mxu0 0
        %392 = vmatpush1.bf16.xpose.msra.mxu0 %v370
        %393 = vmatprep.subr.bf16.mxu0 0
        %394 = vmatpush1.bf16.xpose.msra.mxu0 %v371
        %395 = vmatprep.subr.bf16.mxu0 0
        %396 = vmatpush1.bf16.xpose.msra.mxu0 %v372
        %397 = vmatprep.subr.bf16.mxu0 0
        %398 = vmatpush1.bf16.xpose.msra.mxu0 0
        %399 = vmatprep.subr.bf16.mxu0 0
        %400 = vmatpush1.bf16.xpose.msra.mxu0 0
        %401 = vmatprep.subr.bf16.mxu0 0
        %402 = vmatpush1.bf16.xpose.msra.mxu0 0
        %403 = vmatprep.subr.bf16.mxu0 0
        %404 = vmatpush1.bf16.xpose.msra.mxu0 0
        %405 = vmatprep.subr.bf16.mxu0 0
        %406 = vmatpush1.bf16.xpose.msra.mxu0 0
        %407 = vmatprep.subr.bf16.mxu0 0
        %408 = vmatpush1.bf16.xpose.msra.mxu0 0
        %409 = vmatprep.subr.bf16.mxu0 0
        %410 = vmatpush1.bf16.xpose.msra.mxu0 0
        %411 = vmatprep.subr.bf16.mxu0 0
        %412 = vmatpush1.bf16.xpose.msra.mxu0 0
        %413 = vmatprep.mubr.bf16.mxu0 0
        %414 = vmatmul.mubr.bf16.gmra.mrb[0].mxu0 %v315
        %v415 = vpop.f32.mrb[0].mxu0
        %v416 = vadd.f32 0.0, %v415
        %v417 = vpop.f32.mrb[0].mxu0
        %v418 = vpop.f32.mrb[0].mxu0
        %v419 = vadd.f32 0.0, %v418
        %v420 = vpop.f32.mrb[0].mxu0
        %421 = vmatprep.mubr.bf16.mxu0 0
        %422 = vmatmul.mubr.bf16.gmra.mrb[0].mxu0 %v316
        %v423 = vpop.f32.mrb[0].mxu0
        %v424 = vadd.f32 0.0, %v423
        %v425 = vpop.f32.mrb[0].mxu0
        %v426 = vpop.f32.mrb[0].mxu0
        %v427 = vadd.f32 0.0, %v426
        %v428 = vpop.f32.mrb[0].mxu0
        %429 = vdwg.mxu0
        %v430 = vmul.f32 %v416, 2.0
        %v431 = vmul.f32 %v419, 2.0
        %v432 = vmul.f32 %v424, 2.0
        %v433 = vmul.f32 %v427, 2.0
        %v434 = vsub.f32 %v430, %v308
        %v435 = vsub.f32 %v431, %v310
        %v436 = vsub.f32 %v432, %v312
        %v437 = vsub.f32 %v433, %v314
        %v438 = vld [vmem:[%s281] sm:$0x1]
        %v440 = vlaneseq
        %v441 = vshrl.u32 %v440, 7
        %v442 = vsub.s32 0, %v441
        %v443 = vrot.slane %v438, %v442
        %v445 = vsub.f32 %v434, %v443
        %v446 = vsub.f32 %v435, %v443
        %v447 = vsub.f32 %v436, %v443
        %v448 = vsub.f32 %v437, %v443
        %449 = vst [vmem:[%s278] sm:$0xff] %v445
        %450 = vst [vmem:[%s278 + $0x8] sm:$0xff] %v446
        %451 = vst [vmem:[%s278 + $0x10] sm:$0xff] %v447
        %452 = vst [vmem:[%s278 + $0x18] sm:$0xff] %v448
        %s453 = sand.u32 %s150, 1
        %s454 = scalar_lea.sflag [#allocation4], %s453
        %s455 = sand.u32 %s150, 1
        %s456 = smul.addr %s455, 32
        %s457 = scalar_lea.vmem [#allocation7], %s456
        // Predicated region
        $region45: #{tpu_custom_call.1} parent=35 // pred_check
          %p458 = pneg %p160
        $region46: #{tpu_custom_call.1} parent=35 // pred_check_branch
          %460 = sbr.rel (%p458) target = $region48
        $region47: #{tpu_custom_call.1} parent=35 // pred_region
          %s461 = smul.u32 4, %s27
          %s463 = ssub.s32 512, 512
          %464 = vsyncadd %s454, %s463
          %s465 = smul.addr %s26, 4
          %s466 = sadd.s32 %s461, %s465
          %s467 = smul.addr %s466, 128
          %s468 = scalar_lea.hbm %s4, %s467
          %s469 = sshll.u32 %s457, 4
          %s470 = int_to_ptr.vmem [resolvable:$true] %s469
          %475 = dma.vmem_to_hbm [thread:$0]  %s470, 512, %s468, %s454, 128, 128, 8
        $region48: #{tpu_custom_call.1} parent=35 // pred_fallthru
          _
      $region36: #{tpu_custom_call.1} parent=5 // pred_fallthru
        _
      %p476 = scmp.le.s32.totalorder 2, %s17
      // Predicated region
      $region49: #{tpu_custom_call.1} parent=5 // pred_check
        %p477 = pneg %p476
      $region50: #{tpu_custom_call.1} parent=5 // pred_check_branch
        %479 = sbr.rel (%p477) target = $region52
      $region51: #{tpu_custom_call.1} parent=5 // pred_region
        %s480 = ssub.s32 %s17, 2
        // Predicated region
        $region53: #{tpu_custom_call.1} parent=51 // pred_check
          %p481 = pneg %p166
        $region54: #{tpu_custom_call.1} parent=51 // pred_check_branch
          %483 = sbr.rel (%p481) target = $region56
        $region55: #{tpu_custom_call.1} parent=51 // pred_region
          %s484 = sand.u32 %s151, 1
          %s485 = scalar_lea.sflag [#allocation4], %s484
          %s486 = sand.u32 %s151, 1
          %s487 = smul.addr %s486, 32
          %s488 = scalar_lea.vmem [#allocation7], %s487
          %489 = dma.done %s485, 512
        $region56: #{tpu_custom_call.1} parent=51 // pred_fallthru
          _
      $region52: #{tpu_custom_call.1} parent=5 // pred_fallthru
        _
    $region6: #{tpu_custom_call.1} parent=1 // loop_footer
      %s21 = sadd.s32 1, %s17
    $region7: #{tpu_custom_call.1} parent=1 // loop_footer_branch
      %16 = sbr.rel target = $region3
    $region8: #{tpu_custom_call.1} parent=1 // loop_exit
      _
    %490 = vsyncpa [#allocation3], 1
    %s491 = scalar_lea.sflag [#allocation3], 1
    %492 = vsyncpa %s491, 1
    %493 = vsyncpa [#allocation6], 1
    %s494 = scalar_lea.sflag [#allocation6], 1
    %495 = vsyncpa %s494, 1
    %496 = vsyncpa [#allocation4], 1
    %s497 = scalar_lea.sflag [#allocation4], 1
    %498 = vsyncpa %s497, 1

</llo_original>
